<compile_context>
chip_gen: v6e
topology: v6e:2x2x1
jax: 0.10.0
libtpu: 0.0.40
codegen_flags: <defaults>
</compile_context>

<pallas_src>
import numpy as np
import jax
import jax.numpy as jnp
from jax.experimental import pallas as pl
from jax.experimental.pallas import tpu as pltpu

# ---- module configuration:  QubitVqcHybridGenerator(conv_dims, vertexes,
#      edges, nodes, dropout_rate, n_qubits, n_layers) ------------------------
CONV_DIMS = [32, 64, 128]
VERTEXES = 9
EDGES = 5
NODES = 5
DROPOUT_RATE = 0.0          # nn.Dropout(0.0) == identity
N_QUBITS = 8                # == z_dim of the classical generator
N_LAYERS = 3
INPUT_DIM = 2               # VQC latent input dim (fixed to 2 in the module)

STATE_DIM = 2 ** N_QUBITS   # 256
AMP_DIM = 4                 # 2-qubit RY embedding populates 4 basis states
MONO_DIM = AMP_DIM * AMP_DIM  # 16 amp monomials (quadratic fold of the VQC)
HID_PAD = 128               # hidden widths padded to 128 lanes
EDGE_OUT = EDGES * VERTEXES * VERTEXES   # 405
NODE_OUT = VERTEXES * NODES              # 45
HEAD_OUT = EDGE_OUT + NODE_OUT           # 450
HEAD_PAD = 512              # fused head padded to a multiple of 128

_GRID_BATCH_THRESHOLD = 256   # above this, use the pipelined batch grid
_BATCH_TILE_MAX = 1024        # per-step out tile = 1024*512*4B = 2 MiB (x2 buffers)


# ============================================================================
# Pallas kernel: monomials -> 3x(Linear+Tanh) -> fused symmetric head
# (VQC circuit + Pauli-Z readout are folded into w0; symmetrize/permute into wh)
# ============================================================================
def _generator_kernel(mono_ref, w0, b0, w1, b1, w2, b2, wh, bh, out_ref):
    h = jnp.tanh(jnp.dot(mono_ref[...].astype(jnp.bfloat16), w0[...],
                         preferred_element_type=jnp.float32) + b0[...])
    h = jnp.tanh(jnp.dot(h.astype(jnp.bfloat16), w1[...],
                         preferred_element_type=jnp.float32) + b1[...])
    h = jnp.tanh(jnp.dot(h.astype(jnp.bfloat16), w2[...],
                         preferred_element_type=jnp.float32) + b2[...])
    # fused (symmetrized + permuted) edges head ++ nodes head, lane-dense 512-wide
    out_ref[...] = jnp.dot(h.astype(jnp.bfloat16), wh[...],
                           preferred_element_type=jnp.float32) + bh[...]


def _cost_estimate(batch):
    flops = 2 * batch * (MONO_DIM * HID_PAD + 2 * HID_PAD * HID_PAD
                         + HID_PAD * HEAD_PAD)
    transcendentals = batch * 3 * HID_PAD
    bytes_accessed = (4 * batch * (MONO_DIM + HEAD_PAD)                     # act in/out
                      + 2 * (MONO_DIM * HID_PAD + 2 * HID_PAD * HID_PAD
                             + HID_PAD * HEAD_PAD)                          # bf16 weights
                      + 4 * (3 * HID_PAD + HEAD_PAD))                       # f32 biases
    return pl.CostEstimate(flops=int(flops), transcendentals=int(transcendentals),
                           bytes_accessed=int(bytes_accessed))


def _pick_batch_tile(batch):
    # >= 2 grid steps so v7x's two TensorCores both get work; tile a multiple of 8,
    # capped so double-buffered output + weights stay far under 32 MiB VMEM.
    half = -(-batch // 2)                        # cdiv(batch, 2)
    tb = min(_BATCH_TILE_MAX, ((half + 7) // 8) * 8)
    return max(tb, 8)


def _generator_pallas(mono, consts):
    """mono: (B, 16) f32 amp monomials -> (B, HEAD_PAD) f32 fused logits."""
    batch = mono.shape[0]
    n_in = 1 + len(consts)

    if batch <= _GRID_BATCH_THRESHOLD:
        # Small batch: gridless, everything (weights ~0.2 MiB, activations tiny) in VMEM.
        vmem = pl.BlockSpec(memory_space=pltpu.MemorySpace.VMEM)
        return pl.pallas_call(
            _generator_kernel,
            out_shape=jax.ShapeDtypeStruct((batch, HEAD_PAD), jnp.float32),
            in_specs=[vmem] * n_in,
            out_specs=vmem,
            cost_estimate=_cost_estimate(batch),
        )(mono, *consts)

    # Pipelined batch grid: no batch padding / output slicing (ragged last tile is
    # masked by Pallas), weights resident (constant index_map), batch axis parallel.
    tb = _pick_batch_tile(batch)
    grid = pl.cdiv(batch, tb)
    const_specs = [pl.BlockSpec(c.shape, lambda i: (0, 0)) for c in consts]
    return pl.pallas_call(
        _generator_kernel,
        out_shape=jax.ShapeDtypeStruct((batch, HEAD_PAD), jnp.float32),
        grid=(grid,),
        in_specs=[pl.BlockSpec((tb, MONO_DIM), lambda i: (i, 0))] + const_specs,
        out_specs=pl.BlockSpec((tb, HEAD_PAD), lambda i: (i, 0)),
        compiler_params=pltpu.CompilerParams(
            dimension_semantics=("parallel",),
            vmem_limit_bytes=32 * 1024 * 1024),
        cost_estimate=_cost_estimate(batch),
    )(mono, *consts)


# ============================================================================
# Host-side precompute of the fixed VQC circuit + readout signs
# ============================================================================
def _build_circuit_constants(vqc_weights_np):
    n, dim = N_QUBITS, STATE_DIM
    mat = np.eye(dim, dtype=np.float64)          # rows = evolving basis states

    def apply_ry(m, q, theta):
        ms = m.reshape((dim,) + (2,) * n)
        a0 = np.take(ms, 0, axis=1 + q)
        a1 = np.take(ms, 1, axis=1 + q)
        c, s = np.cos(theta / 2.0), np.sin(theta / 2.0)
        ms = np.stack([c * a0 - s * a1, s * a0 + c * a1], axis=1 + q)
        return ms.reshape(dim, dim)

    def apply_cnot(m, ctrl, tgt):
        idx = np.arange(dim)
        cbit = (idx >> (n - 1 - ctrl)) & 1
        flipped = idx ^ (1 << (n - 1 - tgt))
        perm = np.where(cbit == 1, flipped, idx)
        return m[:, perm]

    for layer in range(N_LAYERS):
        for q in range(n):
            mat = apply_ry(mat, q, float(vqc_weights_np[layer, q]))
        for q in range(n):
            mat = apply_cnot(mat, q, (q + 1) % n)

    # RY(z0) on qubit 0, RY(z1) on qubit 1 of |0...0> populates basis states
    # {0, 64, 128, 192} (qubit 0 = MSB), in the order (00, 01, 10, 11).
    emb_idx = np.array([0, 2 ** (n - 2), 2 ** (n - 1), 2 ** (n - 1) + 2 ** (n - 2)])
    u4 = mat[emb_idx, :].astype(np.float64)                         # (4, 256)

    idx = np.arange(dim)
    signs = np.stack([1.0 - 2.0 * ((idx >> (n - 1 - q)) & 1) for q in range(n)],
                     axis=1).astype(np.float64)                     # (256, 8)
    return u4, signs


# ============================================================================
# Parameter init (PyTorch-Linear-style) + fold/pad into TPU-friendly constants
# ============================================================================
def init_params(key):
    raw = {}
    dims = [N_QUBITS] + CONV_DIMS
    keys = jax.random.split(key, 2 * len(CONV_DIMS) + 5)
    ki = 0
    for i in range(len(CONV_DIMS)):
        fan_in, fan_out = dims[i], dims[i + 1]
        bound = 1.0 / np.sqrt(fan_in)
        raw[f"w{i}"] = jax.random.uniform(keys[ki], (fan_in, fan_out),
                                          jnp.float32, -bound, bound); ki += 1
        raw[f"b{i}"] = jax.random.uniform(keys[ki], (fan_out,),
                                          jnp.float32, -bound, bound); ki += 1
    d_last = CONV_DIMS[-1]
    bound = 1.0 / np.sqrt(d_last)
    raw["we"] = jax.random.uniform(keys[ki], (d_last, EDGE_OUT),
                                   jnp.float32, -bound, bound); ki += 1
    raw["be"] = jax.random.uniform(keys[ki], (EDGE_OUT,),
                                   jnp.float32, -bound, bound); ki += 1
    raw["wn"] = jax.random.uniform(keys[ki], (d_last, NODE_OUT),
                                   jnp.float32, -bound, bound); ki += 1
    raw["bn"] = jax.random.uniform(keys[ki], (NODE_OUT,),
                                   jnp.float32, -bound, bound); ki += 1
    raw["vqc_weights"] = jax.random.uniform(keys[ki], (N_LAYERS, N_QUBITS),
                                            jnp.float32, 0.0, 2.0 * np.pi); ki += 1
    return raw


def build_kernel_consts(raw):
    """Fold circuit (quadratic form) + readout into w0, symmetrize/permute into the
    head, zero-pad widths, fuse heads, cast matmul weights bf16."""
    u4, signs = _build_circuit_constants(np.asarray(raw["vqc_weights"]))
    d0, d1, d2 = CONV_DIMS

    # probs_j = (amp @ u4)_j^2  =>  probs = mono @ Q  with mono_{kl} = amp_k*amp_l
    Q = (u4[:, None, :] * u4[None, :, :]).reshape(MONO_DIM, STATE_DIM)   # (16, 256)
    w0f = signs @ np.asarray(raw["w0"], np.float64)                      # (256, 32)
    w0p = np.zeros((STATE_DIM, HID_PAD), np.float64); w0p[:, :d0] = w0f
    w0q = (Q @ w0p).astype(np.float32)                                   # (16, 128)
    b0p = np.zeros((1, HID_PAD), np.float32); b0p[0, :d0] = np.asarray(raw["b0"])

    w1p = np.zeros((HID_PAD, HID_PAD), np.float32); w1p[:d0, :d1] = np.asarray(raw["w1"])
    b1p = np.zeros((1, HID_PAD), np.float32); b1p[0, :d1] = np.asarray(raw["b1"])

    w2p = np.zeros((HID_PAD, HID_PAD), np.float32); w2p[:d1, :d2] = np.asarray(raw["w2"])
    b2p = np.zeros((1, HID_PAD), np.float32); b2p[0, :d2] = np.asarray(raw["b2"])

    # edges head: fold (e + e^T)/2 and the (0,2,3,1) permute into the columns so
    # the kernel already emits symmetric logits laid out (V, V, E)-contiguous.
    we = np.asarray(raw["we"], np.float32).reshape(d2, EDGES, VERTEXES, VERTEXES)
    we = 0.5 * (we + np.transpose(we, (0, 1, 3, 2)))
    we_fold = np.transpose(we, (0, 2, 3, 1)).reshape(d2, EDGE_OUT)
    be = np.asarray(raw["be"], np.float32).reshape(EDGES, VERTEXES, VERTEXES)
    be = 0.5 * (be + np.transpose(be, (0, 2, 1)))
    be_fold = np.transpose(be, (1, 2, 0)).reshape(EDGE_OUT)

    whp = np.zeros((HID_PAD, HEAD_PAD), np.float32)
    whp[:d2, :EDGE_OUT] = we_fold
    whp[:d2, EDGE_OUT:HEAD_OUT] = np.asarray(raw["wn"])
    bhp = np.zeros((1, HEAD_PAD), np.float32)
    bhp[0, :EDGE_OUT] = be_fold
    bhp[0, EDGE_OUT:HEAD_OUT] = np.asarray(raw["bn"])

    return (jnp.asarray(w0q, jnp.bfloat16), jnp.asarray(b0p),
            jnp.asarray(w1p, jnp.bfloat16), jnp.asarray(b1p),
            jnp.asarray(w2p, jnp.bfloat16), jnp.asarray(b2p),
            jnp.asarray(whp, jnp.bfloat16), jnp.asarray(bhp))


# ============================================================================
# Forward pass
# ============================================================================
@jax.jit
def forward_from_z(z, consts):
    """z: (B, 2) in [0,1) -> (edges_logits (B,V,V,E), nodes_logits (B,V,NODES))."""
    batch = z.shape[0]
    # RY data embedding of (z0, z1) on qubits 0,1 -> 4 nonzero amplitudes
    c, s = jnp.cos(z * 0.5), jnp.sin(z * 0.5)
    amp = jnp.stack([c[:, 0] * c[:, 1], c[:, 0] * s[:, 1],
                     s[:, 0] * c[:, 1], s[:, 0] * s[:, 1]], axis=-1)        # (B, 4)
    mono = (amp[:, :, None] * amp[:, None, :]).reshape(batch, MONO_DIM)     # (B, 16)

    out = _generator_pallas(mono, consts)                                   # (B, 512)

    # glue: pure slice + reshape (symmetrize + permute already folded into weights)
    edges_logits = out[:, :EDGE_OUT].reshape(batch, VERTEXES, VERTEXES, EDGES)
    nodes_logits = out[:, EDGE_OUT:HEAD_OUT].reshape(batch, VERTEXES, NODES)
    # DROPOUT_RATE == 0.0 -> dropout is identity.
    return edges_logits, nodes_logits


def qubit_vqc_hybrid_generator(x, consts, z_key):
    """Full module forward: ignores x's values, only uses its batch size."""
    batch = x.shape[0]
    z = jax.random.uniform(z_key, (batch, INPUT_DIM), jnp.float32)  # torch.rand analogue
    return forward_from_z(z, consts)


# ============================================================================
# Plain-JAX f32 reference (gate-by-gate statevector sim + unpadded MLP,
# symmetrize/permute done the PyTorch way)
# ============================================================================
def _apply_ry(state, q, theta, n):
    b = state.shape[0]
    s = state.reshape((b,) + (2,) * n)
    a0 = jnp.take(s, 0, axis=1 + q)
    a1 = jnp.take(s, 1, axis=1 + q)
    th = jnp.asarray(theta, jnp.float32)
    if th.ndim == 1:
        th = th.reshape((b,) + (1,) * (n - 1))
    c, si = jnp.cos(th / 2.0), jnp.sin(th / 2.0)
    s = jnp.stack([c * a0 - si * a1, si * a0 + c * a1], axis=1 + q)
    return s.reshape(b, 2 ** n)


def _apply_cnot(state, ctrl, tgt, n):
    idx = np.arange(2 ** n)
    cbit = (idx >> (n - 1 - ctrl)) & 1
    flipped = idx ^ (1 << (n - 1 - tgt))
    perm = np.where(cbit == 1, flipped, idx)
    return state[:, perm]


def _z_expectations(state, n):
    probs = state * state
    idx = np.arange(2 ** n)
    signs = np.stack([1.0 - 2.0 * ((idx >> (n - 1 - q)) & 1) for q in range(n)],
                     axis=1).astype(np.float32)
    return probs @ jnp.asarray(signs)


def reference_forward(z, raw):
    batch, n = z.shape[0], N_QUBITS
    state = jnp.zeros((batch, 2 ** n), jnp.float32).at[:, 0].set(1.0)
    for i in range(INPUT_DIM):
        state = _apply_ry(state, i, z[:, i], n)
    for layer in range(N_LAYERS):
        for q in range(n):
            state = _apply_ry(state, q, raw["vqc_weights"][layer, q], n)
        for q in range(n):
            state = _apply_cnot(state, q, (q + 1) % n, n)
    h = _z_expectations(state, n)
    for i in range(len(CONV_DIMS)):
        h = jnp.tanh(h @ raw[f"w{i}"] + raw[f"b{i}"])
    edges = h @ raw["we"] + raw["be"]
    nodes = h @ raw["wn"] + raw["bn"]
    e = edges.reshape(batch, EDGES, VERTEXES, VERTEXES)
    e = (e + jnp.transpose(e, (0, 1, 3, 2))) * 0.5
    return jnp.transpose(e, (0, 2, 3, 1)), nodes.reshape(batch, VERTEXES, NODES)


if __name__ == "__main__":
    key = jax.random.PRNGKey(0)
    kx, kz, kw, kz2 = jax.random.split(key, 4)
    B = 2
    x = jax.random.normal(kx, (B, N_QUBITS), jnp.float32)   # ignored by design

    raw_params = init_params(kw)
    consts = build_kernel_consts(raw_params)

    # -- small batch: gridless VMEM path --------------------------------------
    edges_logits, nodes_logits = qubit_vqc_hybrid_generator(x, consts, kz)
    jax.block_until_ready((edges_logits, nodes_logits))

    assert edges_logits.shape == (B, VERTEXES, VERTEXES, EDGES)
    assert nodes_logits.shape == (B, VERTEXES, NODES)
    assert edges_logits.dtype == jnp.float32 and nodes_logits.dtype == jnp.float32
    assert bool(jnp.allclose(edges_logits,
                             jnp.transpose(edges_logits, (0, 2, 1, 3)), atol=1e-5))

    z_same = jax.random.uniform(kz, (B, INPUT_DIM), jnp.float32)
    e_ref, n_ref = reference_forward(z_same, raw_params)
    # bf16 MXU weights -> loose tolerance vs the f32 reference
    assert bool(jnp.allclose(edges_logits, e_ref, atol=1e-1))
    assert bool(jnp.allclose(nodes_logits, n_ref, atol=1e-1))

    # -- moderate batch: pipelined batch-grid path (ragged last tile) ----------
    B2 = 300
    z2 = jax.random.uniform(kz2, (B2, INPUT_DIM), jnp.float32)
    e2, n2 = forward_from_z(z2, consts)
    jax.block_until_ready((e2, n2))
    assert e2.shape == (B2, VERTEXES, VERTEXES, EDGES)
    assert n2.shape == (B2, VERTEXES, NODES)
    assert bool(jnp.allclose(e2, jnp.transpose(e2, (0, 2, 1, 3)), atol=1e-5))
    e2_ref, n2_ref = reference_forward(z2, raw_params)
    assert bool(jnp.allclose(e2, e2_ref, atol=1e-1))
    assert bool(jnp.allclose(n2, n2_ref, atol=1e-1))

    print("KERNEL_OK")
</pallas_src>

<mosaic_0001>
module attributes {stable_mosaic.version = 11 : i64} {
  func.func @_generator_kernel(%arg0: memref<2x16xf32, #tpu.memory_space<vmem>>, %arg1: memref<16x128xbf16, #tpu.memory_space<vmem>>, %arg2: memref<1x128xf32, #tpu.memory_space<vmem>>, %arg3: memref<128x128xbf16, #tpu.memory_space<vmem>>, %arg4: memref<1x128xf32, #tpu.memory_space<vmem>>, %arg5: memref<128x128xbf16, #tpu.memory_space<vmem>>, %arg6: memref<1x128xf32, #tpu.memory_space<vmem>>, %arg7: memref<128x512xbf16, #tpu.memory_space<vmem>>, %arg8: memref<1x512xf32, #tpu.memory_space<vmem>>, %arg9: memref<2x512xf32, #tpu.memory_space<vmem>>) attributes {dimension_semantics = [], scalar_prefetch = 0 : i64, scratch_operands = 0 : i64, tpu.core_type = #tpu.core_type<tc>} {
    %c0 = arith.constant 0 : index
    %c0_0 = arith.constant 0 : index
    %0 = vector.load %arg0[%c0, %c0_0] : memref<2x16xf32, #tpu.memory_space<vmem>>, vector<2x16xf32>
    %1 = arith.truncf %0 : vector<2x16xf32> to vector<2x16xbf16>
    %c0_1 = arith.constant 0 : index
    %c0_2 = arith.constant 0 : index
    %2 = vector.load %arg1[%c0_1, %c0_2] : memref<16x128xbf16, #tpu.memory_space<vmem>>, vector<16x128xbf16>
    %cst = arith.constant dense<0.000000e+00> : vector<2x128xf32>
    %3 = tpu.matmul %1, %2, %cst {dimension_numbers = #tpu.dot_dimension_numbers<[1], [0], [0], [1], [0, 0, 1, 1], [], []>} : vector<2x16xbf16>, vector<16x128xbf16>, vector<2x128xf32> -> vector<2x128xf32>
    %c0_3 = arith.constant 0 : index
    %c0_4 = arith.constant 0 : index
    %4 = vector.load %arg2[%c0_3, %c0_4] : memref<1x128xf32, #tpu.memory_space<vmem>>, vector<1x128xf32>
    %5 = vector.broadcast %4 : vector<1x128xf32> to vector<2x128xf32>
    %6 = arith.addf %3, %5 : vector<2x128xf32>
    %7 = math.tanh %6 : vector<2x128xf32>
    %8 = arith.truncf %7 : vector<2x128xf32> to vector<2x128xbf16>
    %c0_5 = arith.constant 0 : index
    %c0_6 = arith.constant 0 : index
    %9 = vector.load %arg3[%c0_5, %c0_6] : memref<128x128xbf16, #tpu.memory_space<vmem>>, vector<128x128xbf16>
    %cst_7 = arith.constant dense<0.000000e+00> : vector<2x128xf32>
    %10 = tpu.matmul %8, %9, %cst_7 {dimension_numbers = #tpu.dot_dimension_numbers<[1], [0], [0], [1], [0, 0, 1, 1], [], []>} : vector<2x128xbf16>, vector<128x128xbf16>, vector<2x128xf32> -> vector<2x128xf32>
    %c0_8 = arith.constant 0 : index
    %c0_9 = arith.constant 0 : index
    %11 = vector.load %arg4[%c0_8, %c0_9] : memref<1x128xf32, #tpu.memory_space<vmem>>, vector<1x128xf32>
    %12 = vector.broadcast %11 : vector<1x128xf32> to vector<2x128xf32>
    %13 = arith.addf %10, %12 : vector<2x128xf32>
    %14 = math.tanh %13 : vector<2x128xf32>
    %15 = arith.truncf %14 : vector<2x128xf32> to vector<2x128xbf16>
    %c0_10 = arith.constant 0 : index
    %c0_11 = arith.constant 0 : index
    %16 = vector.load %arg5[%c0_10, %c0_11] : memref<128x128xbf16, #tpu.memory_space<vmem>>, vector<128x128xbf16>
    %cst_12 = arith.constant dense<0.000000e+00> : vector<2x128xf32>
    %17 = tpu.matmul %15, %16, %cst_12 {dimension_numbers = #tpu.dot_dimension_numbers<[1], [0], [0], [1], [0, 0, 1, 1], [], []>} : vector<2x128xbf16>, vector<128x128xbf16>, vector<2x128xf32> -> vector<2x128xf32>
    %c0_13 = arith.constant 0 : index
    %c0_14 = arith.constant 0 : index
    %18 = vector.load %arg6[%c0_13, %c0_14] : memref<1x128xf32, #tpu.memory_space<vmem>>, vector<1x128xf32>
    %19 = vector.broadcast %18 : vector<1x128xf32> to vector<2x128xf32>
    %20 = arith.addf %17, %19 : vector<2x128xf32>
    %21 = math.tanh %20 : vector<2x128xf32>
    %22 = arith.truncf %21 : vector<2x128xf32> to vector<2x128xbf16>
    %c0_15 = arith.constant 0 : index
    %c0_16 = arith.constant 0 : index
    %23 = vector.load %arg7[%c0_15, %c0_16] : memref<128x512xbf16, #tpu.memory_space<vmem>>, vector<128x512xbf16>
    %cst_17 = arith.constant dense<0.000000e+00> : vector<2x512xf32>
    %24 = tpu.matmul %22, %23, %cst_17 {dimension_numbers = #tpu.dot_dimension_numbers<[1], [0], [0], [1], [0, 0, 1, 1], [], []>} : vector<2x128xbf16>, vector<128x512xbf16>, vector<2x512xf32> -> vector<2x512xf32>
    %c0_18 = arith.constant 0 : index
    %c0_19 = arith.constant 0 : index
    %25 = vector.load %arg8[%c0_18, %c0_19] : memref<1x512xf32, #tpu.memory_space<vmem>>, vector<1x512xf32>
    %26 = vector.broadcast %25 : vector<1x512xf32> to vector<2x512xf32>
    %27 = arith.addf %24, %26 : vector<2x512xf32>
    %c0_20 = arith.constant 0 : index
    %c0_21 = arith.constant 0 : index
    %28 = vector.load %arg9[%c0_20, %c0_21] : memref<2x512xf32, #tpu.memory_space<vmem>>, vector<2x512xf32>
    tpu.vector_store %arg9[%c0_20, %c0_21], %27 {strides = array<i32>} : memref<2x512xf32, #tpu.memory_space<vmem>>, vector<2x512xf32>,
    return
  }
}

</mosaic_0001>

<llo_original>
// kernel: forward_from_z.1
$region0: #{forward_from_z.1}
  #allocation0 [shape = 'u32[]', space=smem, size = 0x4, offset = 0x4, fixed_abs, tag = 'smem constant byte address 0x4 - core index']
  #allocation1 [shape = 'u32[144,128]{1,0:T(1,128)}', space=vmem, size = 0x12000, scoped, tag = 'internal scratch']
  %s0 = inlined_call_operand.vmem [shape: f32[2,16], index: 0, kind: input, shape index: {}]
  %s1 = inlined_call_operand.vmem [shape: bf16[16,128], index: 1, kind: input, shape index: {}]
  %s2 = inlined_call_operand.vmem [shape: f32[1,128], index: 2, kind: input, shape index: {}]
  %s3 = inlined_call_operand.vmem [shape: bf16[128,128], index: 3, kind: input, shape index: {}]
  %s4 = inlined_call_operand.hbm [shape: f32[1,128], index: 4, kind: input, shape index: {}]
  %s5 = inlined_call_operand.hbm [shape: bf16[128,128], index: 5, kind: input, shape index: {}]
  %s6 = inlined_call_operand.hbm [shape: f32[1,128], index: 6, kind: input, shape index: {}]
  %s7 = inlined_call_operand.hbm [shape: bf16[128,512], index: 7, kind: input, shape index: {}]
  %s8 = inlined_call_operand.hbm [shape: f32[1,512], index: 8, kind: input, shape index: {}]
  %s9 = inlined_call_operand.vmem [shape: f32[2,512], index: 9, kind: output, shape index: {}]
  %s10 = sld [smem:[#allocation0]]
  $region66: #{forward_from_z.1} parent=0
    _
  %s12 = ssub.s32 1, %s10
  %s13 = scalar_select 0, %s12, %s10
  $region1: #{forward_from_z.1} parent=0
    #allocation2 [shape = 'u8[512]{0}', space=vmem, size = 0x400, scoped, tag = 'input window, operand 4, single buffered']
    #allocation3 [shape = 's32[1]{0}', space=sflag, size = 0x4, scoped, tag = 'scoped memory for forward_from_z.1']
    #allocation4 [shape = 'u8[32768]{0}', space=vmem, size = 0x8000, scoped, tag = 'input window, operand 5, single buffered']
    #allocation5 [shape = 's32[1]{0}', space=sflag, size = 0x4, scoped, tag = 'scoped memory for forward_from_z.1']
    #allocation6 [shape = 'u8[512]{0}', space=vmem, size = 0x400, scoped, tag = 'input window, operand 6, single buffered']
    #allocation7 [shape = 'u8[131072]{0}', space=vmem, size = 0x20000, scoped, tag = 'input window, operand 7, single buffered']
    #allocation8 [shape = 's32[1]{0}', space=sflag, size = 0x4, scoped, tag = 'scoped memory for forward_from_z.1']
    #allocation9 [shape = 'u8[2048]{0}', space=vmem, size = 0x800, scoped, tag = 'input window, operand 8, single buffered']
    %14 = vsyncpa [#allocation3], 0
    %15 = vsyncpa [#allocation5], 0
    %16 = vsyncpa [#allocation8], 0
    // Predicated region
    $region2: #{forward_from_z.1} parent=1 // pred_check
      _
    $region3: #{forward_from_z.1} parent=1 // pred_check_branch
      %18 = sbr.rel (0) target = $region5
    $region4: #{forward_from_z.1} parent=1 // pred_region
      _
    $region5: #{forward_from_z.1} parent=1 // pred_fallthru
      _
    // Predicated region
    $region6: #{forward_from_z.1} parent=1 // pred_check
      _
    $region7: #{forward_from_z.1} parent=1 // pred_check_branch
      %20 = sbr.rel (0) target = $region9
    $region8: #{forward_from_z.1} parent=1 // pred_region
      _
    $region9: #{forward_from_z.1} parent=1 // pred_fallthru
      _
    // Predicated region
    $region10: #{forward_from_z.1} parent=1 // pred_check
      _
    $region11: #{forward_from_z.1} parent=1 // pred_check_branch
      %22 = sbr.rel (0) target = $region13
    $region12: #{forward_from_z.1} parent=1 // pred_region
      _
    $region13: #{forward_from_z.1} parent=1 // pred_fallthru
      _
    // Predicated region
    $region14: #{forward_from_z.1} parent=1 // pred_check
      _
    $region15: #{forward_from_z.1} parent=1 // pred_check_branch
      %24 = sbr.rel (0) target = $region17
    $region16: #{forward_from_z.1} parent=1 // pred_region
      _
    $region17: #{forward_from_z.1} parent=1 // pred_fallthru
      _
    // Predicated region
    $region18: #{forward_from_z.1} parent=1 // pred_check
      _
    $region19: #{forward_from_z.1} parent=1 // pred_check_branch
      %26 = sbr.rel (0) target = $region21
    $region20: #{forward_from_z.1} parent=1 // pred_region
      %s28 = ssub.s32 16, 16
      %29 = vsyncadd [#allocation3], %s28
      %s31 = sshll.u32 [#allocation2], 4
      %s32 = int_to_ptr.vmem [resolvable:$true] %s31
      %34 = dma.hbm_to_vmem [thread:$0]  %s4, 16, %s32, [#allocation3]
    $region21: #{forward_from_z.1} parent=1 // pred_fallthru
      _
    // Predicated region
    $region22: #{forward_from_z.1} parent=1 // pred_check
      _
    $region23: #{forward_from_z.1} parent=1 // pred_check_branch
      %36 = sbr.rel (0) target = $region25
    $region24: #{forward_from_z.1} parent=1 // pred_region
      %s38 = ssub.s32 1024, 1024
      %39 = vsyncadd [#allocation5], %s38
      %s40 = sshll.u32 [#allocation4], 4
      %s41 = int_to_ptr.vmem [resolvable:$true] %s40
      %46 = dma.hbm_to_vmem [thread:$0]  %s5, 1024, %s41, [#allocation5], 64, 64, 4
    $region25: #{forward_from_z.1} parent=1 // pred_fallthru
      _
    // Predicated region
    $region26: #{forward_from_z.1} parent=1 // pred_check
      _
    $region27: #{forward_from_z.1} parent=1 // pred_check_branch
      %48 = sbr.rel (0) target = $region29
    $region28: #{forward_from_z.1} parent=1 // pred_region
      %s50 = ssub.s32 16, 16
      %51 = vsyncadd [#allocation5], %s50
      %s53 = sshll.u32 [#allocation6], 4
      %s54 = int_to_ptr.vmem [resolvable:$true] %s53
      %56 = dma.hbm_to_vmem [thread:$0]  %s6, 16, %s54, [#allocation5]
    $region29: #{forward_from_z.1} parent=1 // pred_fallthru
      _
    // Predicated region
    $region30: #{forward_from_z.1} parent=1 // pred_check
      _
    $region31: #{forward_from_z.1} parent=1 // pred_check_branch
      %58 = sbr.rel (0) target = $region33
    $region32: #{forward_from_z.1} parent=1 // pred_region
      %s60 = ssub.s32 4096, 4096
      %61 = vsyncadd [#allocation8], %s60
      %s62 = sshll.u32 [#allocation7], 4
      %s63 = int_to_ptr.vmem [resolvable:$true] %s62
      %68 = dma.hbm_to_vmem [thread:$0]  %s7, 4096, %s63, [#allocation8], 256, 256, 16
    $region33: #{forward_from_z.1} parent=1 // pred_fallthru
      _
    // Predicated region
    $region34: #{forward_from_z.1} parent=1 // pred_check
      _
    $region35: #{forward_from_z.1} parent=1 // pred_check_branch
      %70 = sbr.rel (0) target = $region37
    $region36: #{forward_from_z.1} parent=1 // pred_region
      %s72 = ssub.s32 64, 64
      %73 = vsyncadd [#allocation8], %s72
      %s75 = sshll.u32 [#allocation9], 4
      %s76 = int_to_ptr.vmem [resolvable:$true] %s75
      %78 = dma.hbm_to_vmem [thread:$0]  %s8, 64, %s76, [#allocation8]
    $region37: #{forward_from_z.1} parent=1 // pred_fallthru
      _
    // Predicated region
    $region38: #{forward_from_z.1} parent=1 // pred_check
      _
    $region39: #{forward_from_z.1} parent=1 // pred_check_branch
      %80 = sbr.rel (0) target = $region41
    $region40: #{forward_from_z.1} parent=1 // pred_region
      %81 = dma.done [#allocation3], 16
    $region41: #{forward_from_z.1} parent=1 // pred_fallthru
      _
    // Predicated region
    $region42: #{forward_from_z.1} parent=1 // pred_check
      _
    $region43: #{forward_from_z.1} parent=1 // pred_check_branch
      %83 = sbr.rel (0) target = $region45
    $region44: #{forward_from_z.1} parent=1 // pred_region
      %84 = dma.done [#allocation5], 1024
    $region45: #{forward_from_z.1} parent=1 // pred_fallthru
      _
    // Predicated region
    $region46: #{forward_from_z.1} parent=1 // pred_check
      _
    $region47: #{forward_from_z.1} parent=1 // pred_check_branch
      %86 = sbr.rel (0) target = $region49
    $region48: #{forward_from_z.1} parent=1 // pred_region
      %87 = dma.done [#allocation5], 16
    $region49: #{forward_from_z.1} parent=1 // pred_fallthru
      _
    // Predicated region
    $region50: #{forward_from_z.1} parent=1 // pred_check
      _
    $region51: #{forward_from_z.1} parent=1 // pred_check_branch
      %89 = sbr.rel (0) target = $region53
    $region52: #{forward_from_z.1} parent=1 // pred_region
      %90 = dma.done [#allocation8], 4096
    $region53: #{forward_from_z.1} parent=1 // pred_fallthru
      _
    // Predicated region
    $region54: #{forward_from_z.1} parent=1 // pred_check
      _
    $region55: #{forward_from_z.1} parent=1 // pred_check_branch
      %92 = sbr.rel (0) target = $region57
    $region56: #{forward_from_z.1} parent=1 // pred_region
      %93 = dma.done [#allocation8], 64
    $region57: #{forward_from_z.1} parent=1 // pred_fallthru
      _
    %v95 = vld [vmem:[%s0] sm:$0x3]
    %v96 = vpack.c.bf16 %v95, %v95
    %v97 = vld [vmem:[%s1] sm:$0xf]
    %v98 = vld [vmem:[%s1 + $0x4] sm:$0xf]
    %v99 = vld [vmem:[%s2] sm:$0x1]
    %v101 = vlaneseq
    %v102 = vshrl.u32 %v101, 7
    %v103 = vsub.s32 0, %v102
    %v104 = vrot.slane %v99, %v103
    %v108 = vunpack.c.l.b16 %v97
    %v109 = vunpack.c.l.b16 %v98
    %v110 = vpack.c.b16 %v109, %v108
    %vm112 = vcmask 130048
    %v114 = vsel %vm112, %v96, 0
    %116 = vmatprep.subr.bf16.mxu0 0
    %117 = vmatpush1.bf16.msra.mxu0 0
    %118 = vmatprep.subr.bf16.mxu0 0
    %119 = vmatpush1.bf16.msra.mxu0 0
    %120 = vmatprep.subr.bf16.mxu0 0
    %121 = vmatpush1.bf16.msra.mxu0 0
    %122 = vmatprep.subr.bf16.mxu0 0
    %123 = vmatpush1.bf16.msra.mxu0 0
    %124 = vmatprep.subr.bf16.mxu0 0
    %125 = vmatpush1.bf16.msra.mxu0 0
    %126 = vmatprep.subr.bf16.mxu0 0
    %127 = vmatpush1.bf16.msra.mxu0 0
    %128 = vmatprep.subr.bf16.mxu0 0
    %129 = vmatpush1.bf16.msra.mxu0 0
    %130 = vmatprep.subr.bf16.mxu0 0
    %131 = vmatpush1.bf16.msra.mxu0 %v110
    %132 = vmatprep.subr.bf16.mxu0 0
    %133 = vmatpush2.bf16.msra.mxu0 0
    %134 = vmatprep.subr.bf16.mxu0 0
    %135 = vmatpush2.bf16.msra.mxu0 0
    %136 = vmatprep.subr.bf16.mxu0 0
    %137 = vmatpush2.bf16.msra.mxu0 0
    %138 = vmatprep.subr.bf16.mxu0 0
    %139 = vmatpush2.bf16.msra.mxu0 0
    %140 = vmatprep.subr.bf16.mxu0 0
    %141 = vmatpush2.bf16.msra.mxu0 0
    %142 = vmatprep.subr.bf16.mxu0 0
    %143 = vmatpush2.bf16.msra.mxu0 0
    %144 = vmatprep.subr.bf16.mxu0 0
    %145 = vmatpush2.bf16.msra.mxu0 0
    %146 = vmatprep.subr.bf16.mxu0 0
    %147 = vmatpush2.bf16.msra.mxu0 0
    %148 = vmatprep.mubr.bf16.mxu0 0
    %149 = vmatmul.mubr.bf16.gmra.mxu0 %v114
    %v150 = vpop.f32.mrf.mxu0
    %v151 = vadd.f32 %v104, %v150
    %v152 = vpop.f32.mrf.mxu0
    %v153 = vpop.f32.mrf.mxu0
    %v154 = vpop.f32.mrf.mxu0
    %155 = vdwg.mxu0
    %v156 = vtanh.pop %v151
    %v157 = vpack.c.bf16 %v156, %v156
    %v158 = vld [vmem:[%s3] sm:$0xf]
    %v159 = vld [vmem:[%s3 + $0x4] sm:$0xf]
    %v160 = vld [vmem:[%s3 + $0x8] sm:$0xf]
    %v161 = vld [vmem:[%s3 + $0xc] sm:$0xf]
    %v162 = vld [vmem:[%s3 + $0x10] sm:$0xf]
    %v163 = vld [vmem:[%s3 + $0x14] sm:$0xf]
    %v164 = vld [vmem:[%s3 + $0x18] sm:$0xf]
    %v165 = vld [vmem:[%s3 + $0x1c] sm:$0xf]
    %v166 = vld [vmem:[%s3 + $0x20] sm:$0xf]
    %v167 = vld [vmem:[%s3 + $0x24] sm:$0xf]
    %v168 = vld [vmem:[%s3 + $0x28] sm:$0xf]
    %v169 = vld [vmem:[%s3 + $0x2c] sm:$0xf]
    %v170 = vld [vmem:[%s3 + $0x30] sm:$0xf]
    %v171 = vld [vmem:[%s3 + $0x34] sm:$0xf]
    %v172 = vld [vmem:[%s3 + $0x38] sm:$0xf]
    %v173 = vld [vmem:[%s3 + $0x3c] sm:$0xf]
    %v174 = vld [vmem:[#allocation2] sm:$0x1]
    %v176 = vlaneseq
    %v177 = vshrl.u32 %v176, 7
    %v178 = vsub.s32 0, %v177
    %v179 = vrot.slane %v174, %v178
    %v197 = vunpack.c.l.b16 %v158
    %v198 = vunpack.c.l.b16 %v159
    %v199 = vunpack.c.l.b16 %v160
    %v200 = vunpack.c.l.b16 %v161
    %v201 = vunpack.c.l.b16 %v162
    %v202 = vunpack.c.l.b16 %v163
    %v203 = vunpack.c.l.b16 %v164
    %v204 = vunpack.c.l.b16 %v165
    %v205 = vunpack.c.l.b16 %v166
    %v206 = vunpack.c.l.b16 %v167
    %v207 = vunpack.c.l.b16 %v168
    %v208 = vunpack.c.l.b16 %v169
    %v209 = vunpack.c.l.b16 %v170
    %v210 = vunpack.c.l.b16 %v171
    %v211 = vunpack.c.l.b16 %v172
    %v212 = vunpack.c.l.b16 %v173
    %v213 = vpack.c.b16 %v198, %v197
    %v214 = vpack.c.b16 %v200, %v199
    %v215 = vpack.c.b16 %v202, %v201
    %v216 = vpack.c.b16 %v204, %v203
    %v217 = vpack.c.b16 %v206, %v205
    %v218 = vpack.c.b16 %v208, %v207
    %v219 = vpack.c.b16 %v210, %v209
    %v220 = vpack.c.b16 %v212, %v211
    %229 = vmatprep.subr.bf16.mxu0 0
    %230 = vmatpush1.bf16.msra.mxu0 %v220
    %231 = vmatprep.subr.bf16.mxu0 0
    %232 = vmatpush1.bf16.msra.mxu0 %v219
    %233 = vmatprep.subr.bf16.mxu0 0
    %234 = vmatpush1.bf16.msra.mxu0 %v218
    %235 = vmatprep.subr.bf16.mxu0 0
    %236 = vmatpush1.bf16.msra.mxu0 %v217
    %237 = vmatprep.subr.bf16.mxu0 0
    %238 = vmatpush1.bf16.msra.mxu0 %v216
    %239 = vmatprep.subr.bf16.mxu0 0
    %240 = vmatpush1.bf16.msra.mxu0 %v215
    %241 = vmatprep.subr.bf16.mxu0 0
    %242 = vmatpush1.bf16.msra.mxu0 %v214
    %243 = vmatprep.subr.bf16.mxu0 0
    %244 = vmatpush1.bf16.msra.mxu0 %v213
    %245 = vmatprep.subr.bf16.mxu0 0
    %246 = vmatpush2.bf16.msra.mxu0 0
    %247 = vmatprep.subr.bf16.mxu0 0
    %248 = vmatpush2.bf16.msra.mxu0 0
    %249 = vmatprep.subr.bf16.mxu0 0
    %250 = vmatpush2.bf16.msra.mxu0 0
    %251 = vmatprep.subr.bf16.mxu0 0
    %252 = vmatpush2.bf16.msra.mxu0 0
    %253 = vmatprep.subr.bf16.mxu0 0
    %254 = vmatpush2.bf16.msra.mxu0 0
    %255 = vmatprep.subr.bf16.mxu0 0
    %256 = vmatpush2.bf16.msra.mxu0 0
    %257 = vmatprep.subr.bf16.mxu0 0
    %258 = vmatpush2.bf16.msra.mxu0 0
    %259 = vmatprep.subr.bf16.mxu0 0
    %260 = vmatpush2.bf16.msra.mxu0 0
    %261 = vmatprep.mubr.bf16.mxu0 0
    %262 = vmatmul.mubr.bf16.gmra.mxu0 %v157
    %v263 = vpop.f32.mrf.mxu0
    %v264 = vadd.f32 %v179, %v263
    %v265 = vpop.f32.mrf.mxu0
    %v266 = vpop.f32.mrf.mxu0
    %v267 = vpop.f32.mrf.mxu0
    %268 = vdwg.mxu0
    %v269 = vtanh.pop %v264
    %v270 = vpack.c.bf16 %v269, %v269
    %v271 = vld [vmem:[#allocation4] sm:$0xf]
    %v272 = vld [vmem:[#allocation4 + $0x4] sm:$0xf]
    %v273 = vld [vmem:[#allocation4 + $0x8] sm:$0xf]
    %v274 = vld [vmem:[#allocation4 + $0xc] sm:$0xf]
    %v275 = vld [vmem:[#allocation4 + $0x10] sm:$0xf]
    %v276 = vld [vmem:[#allocation4 + $0x14] sm:$0xf]
    %v277 = vld [vmem:[#allocation4 + $0x18] sm:$0xf]
    %v278 = vld [vmem:[#allocation4 + $0x1c] sm:$0xf]
    %v279 = vld [vmem:[#allocation4 + $0x20] sm:$0xf]
    %v280 = vld [vmem:[#allocation4 + $0x24] sm:$0xf]
    %v281 = vld [vmem:[#allocation4 + $0x28] sm:$0xf]
    %v282 = vld [vmem:[#allocation4 + $0x2c] sm:$0xf]
    %v283 = vld [vmem:[#allocation4 + $0x30] sm:$0xf]
    %v284 = vld [vmem:[#allocation4 + $0x34] sm:$0xf]
    %v285 = vld [vmem:[#allocation4 + $0x38] sm:$0xf]
    %v286 = vld [vmem:[#allocation4 + $0x3c] sm:$0xf]
    %v287 = vld [vmem:[#allocation6] sm:$0x1]
    %v289 = vlaneseq
    %v290 = vshrl.u32 %v289, 7
    %v291 = vsub.s32 0, %v290
    %v292 = vrot.slane %v287, %v291
    %v310 = vunpack.c.l.b16 %v271
    %v311 = vunpack.c.l.b16 %v272
    %v312 = vunpack.c.l.b16 %v273
    %v313 = vunpack.c.l.b16 %v274
    %v314 = vunpack.c.l.b16 %v275
    %v315 = vunpack.c.l.b16 %v276
    %v316 = vunpack.c.l.b16 %v277
    %v317 = vunpack.c.l.b16 %v278
    %v318 = vunpack.c.l.b16 %v279
    %v319 = vunpack.c.l.b16 %v280
    %v320 = vunpack.c.l.b16 %v281
    %v321 = vunpack.c.l.b16 %v282
    %v322 = vunpack.c.l.b16 %v283
    %v323 = vunpack.c.l.b16 %v284
    %v324 = vunpack.c.l.b16 %v285
    %v325 = vunpack.c.l.b16 %v286
    %v326 = vpack.c.b16 %v311, %v310
    %v327 = vpack.c.b16 %v313, %v312
    %v328 = vpack.c.b16 %v315, %v314
    %v329 = vpack.c.b16 %v317, %v316
    %v330 = vpack.c.b16 %v319, %v318
    %v331 = vpack.c.b16 %v321, %v320
    %v332 = vpack.c.b16 %v323, %v322
    %v333 = vpack.c.b16 %v325, %v324
    %342 = vmatprep.subr.bf16.mxu0 0
    %343 = vmatpush1.bf16.msra.mxu0 %v333
    %344 = vmatprep.subr.bf16.mxu0 0
    %345 = vmatpush1.bf16.msra.mxu0 %v332
    %346 = vmatprep.subr.bf16.mxu0 0
    %347 = vmatpush1.bf16.msra.mxu0 %v331
    %348 = vmatprep.subr.bf16.mxu0 0
    %349 = vmatpush1.bf16.msra.mxu0 %v330
    %350 = vmatprep.subr.bf16.mxu0 0
    %351 = vmatpush1.bf16.msra.mxu0 %v329
    %352 = vmatprep.subr.bf16.mxu0 0
    %353 = vmatpush1.bf16.msra.mxu0 %v328
    %354 = vmatprep.subr.bf16.mxu0 0
    %355 = vmatpush1.bf16.msra.mxu0 %v327
    %356 = vmatprep.subr.bf16.mxu0 0
    %357 = vmatpush1.bf16.msra.mxu0 %v326
    %358 = vmatprep.subr.bf16.mxu0 0
    %359 = vmatpush2.bf16.msra.mxu0 0
    %360 = vmatprep.subr.bf16.mxu0 0
    %361 = vmatpush2.bf16.msra.mxu0 0
    %362 = vmatprep.subr.bf16.mxu0 0
    %363 = vmatpush2.bf16.msra.mxu0 0
    %364 = vmatprep.subr.bf16.mxu0 0
    %365 = vmatpush2.bf16.msra.mxu0 0
    %366 = vmatprep.subr.bf16.mxu0 0
    %367 = vmatpush2.bf16.msra.mxu0 0
    %368 = vmatprep.subr.bf16.mxu0 0
    %369 = vmatpush2.bf16.msra.mxu0 0
    %370 = vmatprep.subr.bf16.mxu0 0
    %371 = vmatpush2.bf16.msra.mxu0 0
    %372 = vmatprep.subr.bf16.mxu0 0
    %373 = vmatpush2.bf16.msra.mxu0 0
    %374 = vmatprep.mubr.bf16.mxu0 0
    %375 = vmatmul.mubr.bf16.gmra.mxu0 %v270
    %v376 = vpop.f32.mrf.mxu0
    %v377 = vadd.f32 %v292, %v376
    %v378 = vpop.f32.mrf.mxu0
    %v379 = vpop.f32.mrf.mxu0
    %v380 = vpop.f32.mrf.mxu0
    %381 = vdwg.mxu0
    %v382 = vtanh.pop %v377
    %v383 = vpack.c.bf16 %v382, %v382
    %v384 = vld [vmem:[#allocation7] sm:$0xff]
    %v385 = vld [vmem:[#allocation7 + $0x8] sm:$0xff]
    %v386 = vld [vmem:[#allocation7 + $0x10] sm:$0xff]
    %v387 = vld [vmem:[#allocation7 + $0x18] sm:$0xff]
    %v388 = vld [vmem:[#allocation7 + $0x20] sm:$0xff]
    %v389 = vld [vmem:[#allocation7 + $0x28] sm:$0xff]
    %v390 = vld [vmem:[#allocation7 + $0x30] sm:$0xff]
    %v391 = vld [vmem:[#allocation7 + $0x38] sm:$0xff]
    %v392 = vld [vmem:[#allocation7 + $0x40] sm:$0xff]
    %v393 = vld [vmem:[#allocation7 + $0x48] sm:$0xff]
    %v394 = vld [vmem:[#allocation7 + $0x50] sm:$0xff]
    %v395 = vld [vmem:[#allocation7 + $0x58] sm:$0xff]
    %v396 = vld [vmem:[#allocation7 + $0x60] sm:$0xff]
    %v397 = vld [vmem:[#allocation7 + $0x68] sm:$0xff]
    %v398 = vld [vmem:[#allocation7 + $0x70] sm:$0xff]
    %v399 = vld [vmem:[#allocation7 + $0x78] sm:$0xff]
    %v400 = vld [vmem:[#allocation7 + $0x80] sm:$0xff]
    %v401 = vld [vmem:[#allocation7 + $0x88] sm:$0xff]
    %v402 = vld [vmem:[#allocation7 + $0x90] sm:$0xff]
    %v403 = vld [vmem:[#allocation7 + $0x98] sm:$0xff]
    %v404 = vld [vmem:[#allocation7 + $0xa0] sm:$0xff]
    %v405 = vld [vmem:[#allocation7 + $0xa8] sm:$0xff]
    %v406 = vld [vmem:[#allocation7 + $0xb0] sm:$0xff]
    %v407 = vld [vmem:[#allocation7 + $0xb8] sm:$0xff]
    %v408 = vld [vmem:[#allocation7 + $0xc0] sm:$0xff]
    %v409 = vld [vmem:[#allocation7 + $0xc8] sm:$0xff]
    %v410 = vld [vmem:[#allocation7 + $0xd0] sm:$0xff]
    %v411 = vld [vmem:[#allocation7 + $0xd8] sm:$0xff]
    %v412 = vld [vmem:[#allocation7 + $0xe0] sm:$0xff]
    %v413 = vld [vmem:[#allocation7 + $0xe8] sm:$0xff]
    %v414 = vld [vmem:[#allocation7 + $0xf0] sm:$0xff]
    %v415 = vld [vmem:[#allocation7 + $0xf8] sm:$0xff]
    %v416 = vld [vmem:[#allocation9] sm:$0xf]
    %v418 = vlaneseq
    %v419 = vshrl.u32 %v418, 7
    %v420 = vsub.s32 0, %v419
    %v421 = vrot.slane %v416, %v420
    %v422 = vlaneseq
    %v423 = vshrl.u32 %v422, 7
    %v424 = vsub.s32 1, %v423
    %v425 = vrot.slane %v416, %v424
    %v426 = vlaneseq
    %v427 = vshrl.u32 %v426, 7
    %v428 = vsub.s32 2, %v427
    %v429 = vrot.slane %v416, %v428
    %v430 = vlaneseq
    %v431 = vshrl.u32 %v430, 7
    %v432 = vsub.s32 3, %v431
    %v433 = vrot.slane %v416, %v432
    %v470 = vunpack.c.l.b16 %v384
    %v471 = vunpack.c.h.b16 %v384
    %v472 = vunpack.c.l.b16 %v385
    %v473 = vunpack.c.h.b16 %v385
    %v474 = vunpack.c.l.b16 %v386
    %v475 = vunpack.c.h.b16 %v386
    %v476 = vunpack.c.l.b16 %v387
    %v477 = vunpack.c.h.b16 %v387
    %v478 = vunpack.c.l.b16 %v388
    %v479 = vunpack.c.h.b16 %v388
    %v480 = vunpack.c.l.b16 %v389
    %v481 = vunpack.c.h.b16 %v389
    %v482 = vunpack.c.l.b16 %v390
    %v483 = vunpack.c.h.b16 %v390
    %v484 = vunpack.c.l.b16 %v391
    %v485 = vunpack.c.h.b16 %v391
    %v486 = vunpack.c.l.b16 %v392
    %v487 = vunpack.c.h.b16 %v392
    %v488 = vunpack.c.l.b16 %v393
    %v489 = vunpack.c.h.b16 %v393
    %v490 = vunpack.c.l.b16 %v394
    %v491 = vunpack.c.h.b16 %v394
    %v492 = vunpack.c.l.b16 %v395
    %v493 = vunpack.c.h.b16 %v395
    %v494 = vunpack.c.l.b16 %v396
    %v495 = vunpack.c.h.b16 %v396
    %v496 = vunpack.c.l.b16 %v397
    %v497 = vunpack.c.h.b16 %v397
    %v498 = vunpack.c.l.b16 %v398
    %v499 = vunpack.c.h.b16 %v398
    %v500 = vunpack.c.l.b16 %v399
    %v501 = vunpack.c.h.b16 %v399
    %v502 = vunpack.c.l.b16 %v400
    %v503 = vunpack.c.h.b16 %v400
    %v504 = vunpack.c.l.b16 %v401
    %v505 = vunpack.c.h.b16 %v401
    %v506 = vunpack.c.l.b16 %v402
    %v507 = vunpack.c.h.b16 %v402
    %v508 = vunpack.c.l.b16 %v403
    %v509 = vunpack.c.h.b16 %v403
    %v510 = vunpack.c.l.b16 %v404
    %v511 = vunpack.c.h.b16 %v404
    %v512 = vunpack.c.l.b16 %v405
    %v513 = vunpack.c.h.b16 %v405
    %v514 = vunpack.c.l.b16 %v406
    %v515 = vunpack.c.h.b16 %v406
    %v516 = vunpack.c.l.b16 %v407
    %v517 = vunpack.c.h.b16 %v407
    %v518 = vunpack.c.l.b16 %v408
    %v519 = vunpack.c.h.b16 %v408
    %v520 = vunpack.c.l.b16 %v409
    %v521 = vunpack.c.h.b16 %v409
    %v522 = vunpack.c.l.b16 %v410
    %v523 = vunpack.c.h.b16 %v410
    %v524 = vunpack.c.l.b16 %v411
    %v525 = vunpack.c.h.b16 %v411
    %v526 = vunpack.c.l.b16 %v412
    %v527 = vunpack.c.h.b16 %v412
    %v528 = vunpack.c.l.b16 %v413
    %v529 = vunpack.c.h.b16 %v413
    %v530 = vunpack.c.l.b16 %v414
    %v531 = vunpack.c.h.b16 %v414
    %v532 = vunpack.c.l.b16 %v415
    %v533 = vunpack.c.h.b16 %v415
    %v534 = vpack.c.b16 %v474, %v470
    %v535 = vpack.c.b16 %v475, %v471
    %v536 = vpack.c.b16 %v476, %v472
    %v537 = vpack.c.b16 %v477, %v473
    %v538 = vpack.c.b16 %v482, %v478
    %v539 = vpack.c.b16 %v483, %v479
    %v540 = vpack.c.b16 %v484, %v480
    %v541 = vpack.c.b16 %v485, %v481
    %v542 = vpack.c.b16 %v490, %v486
    %v543 = vpack.c.b16 %v491, %v487
    %v544 = vpack.c.b16 %v492, %v488
    %v545 = vpack.c.b16 %v493, %v489
    %v546 = vpack.c.b16 %v498, %v494
    %v547 = vpack.c.b16 %v499, %v495
    %v548 = vpack.c.b16 %v500, %v496
    %v549 = vpack.c.b16 %v501, %v497
    %v550 = vpack.c.b16 %v506, %v502
    %v551 = vpack.c.b16 %v507, %v503
    %v552 = vpack.c.b16 %v508, %v504
    %v553 = vpack.c.b16 %v509, %v505
    %v554 = vpack.c.b16 %v514, %v510
    %v555 = vpack.c.b16 %v515, %v511
    %v556 = vpack.c.b16 %v516, %v512
    %v557 = vpack.c.b16 %v517, %v513
    %v558 = vpack.c.b16 %v522, %v518
    %v559 = vpack.c.b16 %v523, %v519
    %v560 = vpack.c.b16 %v524, %v520
    %v561 = vpack.c.b16 %v525, %v521
    %v562 = vpack.c.b16 %v530, %v526
    %v563 = vpack.c.b16 %v531, %v527
    %v564 = vpack.c.b16 %v532, %v528
    %v565 = vpack.c.b16 %v533, %v529
    %598 = vmatprep.subr.bf16.mxu0 %v563
    %599 = vmatpush1.bf16.msra.mxu0 %v562
    %600 = vmatprep.subr.bf16.mxu0 %v559
    %601 = vmatpush1.bf16.msra.mxu0 %v558
    %602 = vmatprep.subr.bf16.mxu0 %v555
    %603 = vmatpush1.bf16.msra.mxu0 %v554
    %604 = vmatprep.subr.bf16.mxu0 %v551
    %605 = vmatpush1.bf16.msra.mxu0 %v550
    %606 = vmatprep.subr.bf16.mxu0 %v547
    %607 = vmatpush1.bf16.msra.mxu0 %v546
    %608 = vmatprep.subr.bf16.mxu0 %v543
    %609 = vmatpush1.bf16.msra.mxu0 %v542
    %610 = vmatprep.subr.bf16.mxu0 %v539
    %611 = vmatpush1.bf16.msra.mxu0 %v538
    %612 = vmatprep.subr.bf16.mxu0 %v535
    %613 = vmatpush1.bf16.msra.mxu0 %v534
    %614 = vmatprep.subr.bf16.mxu0 0
    %615 = vmatpush2.bf16.msra.mxu0 0
    %616 = vmatprep.subr.bf16.mxu0 0
    %617 = vmatpush2.bf16.msra.mxu0 0
    %618 = vmatprep.subr.bf16.mxu0 0
    %619 = vmatpush2.bf16.msra.mxu0 0
    %620 = vmatprep.subr.bf16.mxu0 0
    %621 = vmatpush2.bf16.msra.mxu0 0
    %622 = vmatprep.subr.bf16.mxu0 0
    %623 = vmatpush2.bf16.msra.mxu0 0
    %624 = vmatprep.subr.bf16.mxu0 0
    %625 = vmatpush2.bf16.msra.mxu0 0
    %626 = vmatprep.subr.bf16.mxu0 0
    %627 = vmatpush2.bf16.msra.mxu0 0
    %628 = vmatprep.subr.bf16.mxu0 0
    %629 = vmatpush2.bf16.msra.mxu0 0
    %630 = vmatprep.mubr.bf16.mxu0 0
    %631 = vmatmul.mubr.bf16.gmra.mxu0 %v383
    %v632 = vpop.f32.mrf.mxu0
    %v633 = vadd.f32 %v421, %v632
    %v634 = vpop.f32.mrf.mxu0
    %v635 = vadd.f32 %v425, %v634
    %v636 = vpop.f32.mrf.mxu0
    %v637 = vpop.f32.mrf.mxu0
    %638 = vdwg.mxu0
    %639 = vmatprep.subr.bf16.mxu0 %v565
    %640 = vmatpush1.bf16.msra.mxu0 %v564
    %641 = vmatprep.subr.bf16.mxu0 %v561
    %642 = vmatpush1.bf16.msra.mxu0 %v560
    %643 = vmatprep.subr.bf16.mxu0 %v557
    %644 = vmatpush1.bf16.msra.mxu0 %v556
    %645 = vmatprep.subr.bf16.mxu0 %v553
    %646 = vmatpush1.bf16.msra.mxu0 %v552
    %647 = vmatprep.subr.bf16.mxu0 %v549
    %648 = vmatpush1.bf16.msra.mxu0 %v548
    %649 = vmatprep.subr.bf16.mxu0 %v545
    %650 = vmatpush1.bf16.msra.mxu0 %v544
    %651 = vmatprep.subr.bf16.mxu0 %v541
    %652 = vmatpush1.bf16.msra.mxu0 %v540
    %653 = vmatprep.subr.bf16.mxu0 %v537
    %654 = vmatpush1.bf16.msra.mxu0 %v536
    %655 = vmatprep.subr.bf16.mxu0 0
    %656 = vmatpush2.bf16.msra.mxu0 0
    %657 = vmatprep.subr.bf16.mxu0 0
    %658 = vmatpush2.bf16.msra.mxu0 0
    %659 = vmatprep.subr.bf16.mxu0 0
    %660 = vmatpush2.bf16.msra.mxu0 0
    %661 = vmatprep.subr.bf16.mxu0 0
    %662 = vmatpush2.bf16.msra.mxu0 0
    %663 = vmatprep.subr.bf16.mxu0 0
    %664 = vmatpush2.bf16.msra.mxu0 0
    %665 = vmatprep.subr.bf16.mxu0 0
    %666 = vmatpush2.bf16.msra.mxu0 0
    %667 = vmatprep.subr.bf16.mxu0 0
    %668 = vmatpush2.bf16.msra.mxu0 0
    %669 = vmatprep.subr.bf16.mxu0 0
    %670 = vmatpush2.bf16.msra.mxu0 0
    %671 = vmatprep.mubr.bf16.mxu0 0
    %672 = vmatmul.mubr.bf16.gmra.mxu0 %v383
    %v673 = vpop.f32.mrf.mxu0
    %v674 = vadd.f32 %v429, %v673
    %v675 = vpop.f32.mrf.mxu0
    %v676 = vadd.f32 %v433, %v675
    %v677 = vpop.f32.mrf.mxu0
    %v678 = vpop.f32.mrf.mxu0
    %679 = vdwg.mxu0
    %v684 = vcombine.low %v633, %v635
    %v685 = vcombine.low %v674, %v676
    %v687 = vunpack.c.l.s4 1983009808
    %v688 = vunpack.c.0.s8 %v687
    %v689 = vlaneseq
    %v690 = vshrl.u32 %v689, 7
    %v691 = vsub.s32 %v688, %v690
    %v692 = vrot.slane %v684, %v691
    %v694 = vunpack.c.l.s4 1983009808
    %v695 = vunpack.c.0.s8 %v694
    %v696 = vlaneseq
    %v697 = vshrl.u32 %v696, 7
    %v698 = vsub.s32 %v695, %v697
    %v699 = vrot.slane %v685, %v698
    %v700 = vcombine.low %v692, %v699
    %702 = vst [vmem:[%s9] sm:$0xff] %v700
    // Predicated region
    $region58: #{forward_from_z.1} parent=1 // pred_check
      _
    $region59: #{forward_from_z.1} parent=1 // pred_check_branch
      %704 = sbr.rel (0) target = $region61
    $region60: #{forward_from_z.1} parent=1 // pred_region
      _
    $region61: #{forward_from_z.1} parent=1 // pred_fallthru
      _
    // Predicated region
    $region62: #{forward_from_z.1} parent=1 // pred_check
      _
    $region63: #{forward_from_z.1} parent=1 // pred_check_branch
      %706 = sbr.rel (0) target = $region65
    $region64: #{forward_from_z.1} parent=1 // pred_region
      _
    $region65: #{forward_from_z.1} parent=1 // pred_fallthru
      _
    %707 = vsyncpa [#allocation3], 1
    %708 = vsyncpa [#allocation5], 1
    %709 = vsyncpa [#allocation8], 1

</llo_original>
